<compile_context>
chip_gen: v6e
topology: v6e:2x2x1
jax: 0.10.0
libtpu: 0.0.40
codegen_flags: <defaults>
</compile_context>

<pallas_src>
import functools
import math

import jax
import jax.numpy as jnp
from jax.experimental import pallas as pl
from jax.experimental.pallas import tpu as pltpu


def _round_up(a, b):
    return ((a + b - 1) // b) * b


def _pick_tile(total, want, quantum=128):
    """Largest multiple of `quantum` <= min(want, total) that divides `total`.

    Requires total % quantum == 0.
    """
    cand = min(want, total)
    cand = max((cand // quantum) * quantum, quantum)
    while total % cand != 0:
        cand -= quantum
    return cand


def _vmem_capacity_bytes():
    try:
        return int(pltpu.get_tpu_info().vmem_capacity_bytes)
    except Exception:
        return 128 * 1024 * 1024  # v5e/v6e default; conservative for unknowns


# ---------------------------------------------------------------------------
# Kernels
# ---------------------------------------------------------------------------

def _linear_add_add_kernel_f32out(x_ref, wt_ref, b_ref, y_ref, z_ref, o_ref):
    """f32 output: accumulate directly into the resident output block."""
    k = pl.program_id(2)

    @pl.when(k == 0)
    def _():
        # Fold bias + residuals into the accumulator init; epilogue disappears.
        o_ref[...] = (b_ref[...]
                      + y_ref[...].astype(jnp.float32)
                      + z_ref[...].astype(jnp.float32))

    o_ref[...] += jnp.dot(x_ref[...], wt_ref[...],
                          preferred_element_type=jnp.float32)


def _linear_add_add_kernel_acc(x_ref, wt_ref, b_ref, y_ref, z_ref, o_ref, acc_ref):
    """Generic output dtype: f32 VMEM accumulator, cast+store on last k."""
    k = pl.program_id(2)

    @pl.when(k == 0)
    def _():
        acc_ref[...] = (b_ref[...]
                        + y_ref[...].astype(jnp.float32)
                        + z_ref[...].astype(jnp.float32))

    acc_ref[...] += jnp.dot(x_ref[...], wt_ref[...],
                            preferred_element_type=jnp.float32)

    @pl.when(k == pl.num_programs(2) - 1)
    def _():
        o_ref[...] = acc_ref[...].astype(o_ref.dtype)


# ---------------------------------------------------------------------------
# Parameter prep (one-time, outside the per-step path)
# ---------------------------------------------------------------------------

def prepare_params(weight, bias=None, *, compute_dtype=jnp.bfloat16):
    """weight: [N, K] (PyTorch nn.Linear layout) -> W^T [Kp, Np] in compute dtype.

    Np is padded to a multiple of 128 (lane-dense stores).  K is only padded
    (to a multiple of 128) when it is both large and not 128-aligned; small or
    aligned K stays un-padded so the activation never needs a K pad pass.
    bias: [N] (or None) -> [1, Np] float32, zero-padded.
    Tile sizes are derived on the call side purely from the returned shapes, so
    there is no tiling knob to keep in sync between prep and call.
    """
    N, K = weight.shape
    Np = _round_up(N, 128)
    if K % 128 == 0 or K <= 512:
        Kp = K                      # single-K-block or already lane-aligned
    else:
        Kp = _round_up(K, 128)

    wt = weight.T.astype(compute_dtype)
    if (Kp, Np) != (K, N):
        wt = jnp.pad(wt, ((0, Kp - K), (0, Np - N)))

    if bias is None:
        b2 = jnp.zeros((1, Np), jnp.float32)
    else:
        b2 = jnp.pad(bias.astype(jnp.float32), (0, Np - N)).reshape(1, Np)
    return wt, b2


# ---------------------------------------------------------------------------
# Wrapper
# ---------------------------------------------------------------------------

@functools.partial(jax.jit, static_argnames=("tm", "tn", "tk"))
def linear_add_add(x, wt, bias2d, y, z, *, tm=512, tn=1024, tk=512):
    """Computes x @ W^T + b + y + z with a tiled Pallas TPU kernel.

    x:      [..., K]
    wt:     [Kp, Np]  pre-transposed / pre-cast / pre-padded weight (prepare_params)
    bias2d: [1, Np]   float32
    y, z:   [..., N]  residuals (N = true out_features)
    """
    lead = x.shape[:-1]
    K = x.shape[-1]
    Kp, Np = wt.shape
    N = y.shape[-1]
    M = int(math.prod(lead)) if lead else 1
    out_dtype = x.dtype
    itm = lambda d: jnp.dtype(d).itemsize

    # ---- tile selection (derived only from shapes, consistent with prep) ----
    tm_eff = min(tm, _round_up(M, 8))
    tn_eff = _pick_tile(Np, tn, 128)
    if Kp % 128 != 0:
        tk_eff = Kp                       # single K block (Kp == K, un-padded)
    else:
        tk_eff = _pick_tile(Kp, tk, 128)

    grid_m = pl.cdiv(M, tm_eff)
    # v7x has 2 TensorCores sharded over the "parallel" axes: for decode-style
    # shapes (single M tile) keep at least 2 tiles along N so neither TC idles.
    if grid_m == 1 and Np // tn_eff == 1 and Np >= 256:
        tn_eff = _pick_tile(Np, Np // 2, 128)
    grid_n = Np // tn_eff
    grid_k = Kp // tk_eff
    grid = (grid_m, grid_n, grid_k)

    # ---- activation prep: one bf16 cast of x, NO M/N pads, K pad only if Kp>K
    x2 = x.reshape(M, K).astype(wt.dtype)
    if Kp != K:
        x2 = jnp.pad(x2, ((0, 0), (0, Kp - K)))   # zeros: safe vs zero-padded W
    y2 = y.reshape(M, N)
    z2 = z.reshape(M, N)

    use_acc_scratch = out_dtype != jnp.float32
    kernel = _linear_add_add_kernel_acc if use_acc_scratch else _linear_add_add_kernel_f32out
    scratch_shapes = ([pltpu.VMEM((tm_eff, tn_eff), jnp.float32)]
                      if use_acc_scratch else [])

    # ---- VMEM budget: double-buffered streaming tiles (+ optional f32 acc) ----
    tile_bytes = (
        2 * tm_eff * tk_eff * itm(x2.dtype)                     # x (bf16)
        + 2 * tk_eff * tn_eff * itm(wt.dtype)                   # W^T
        + 2 * tm_eff * tn_eff * itm(y2.dtype)                   # y
        + 2 * tm_eff * tn_eff * itm(z2.dtype)                   # z
        + 2 * tm_eff * tn_eff * itm(out_dtype)                  # out
        + 2 * tn_eff * 4                                        # bias
        + (tm_eff * tn_eff * 4 if use_acc_scratch else 0)       # acc scratch
    )
    vmem_cap = _vmem_capacity_bytes()
    vmem_budget = min((vmem_cap * 3) // 4, 100 * 1024 * 1024)   # 48 MiB on v7x
    vmem_limit = int(min(max(2 * tile_bytes, 32 * 1024 * 1024), vmem_budget))

    # ---- cost estimate with true re-read factors (advisory for XLA) ----
    cost = pl.CostEstimate(
        flops=2 * M * Kp * Np,
        transcendentals=0,
        bytes_accessed=int(
            M * Kp * itm(x2.dtype) * grid_n        # x re-read once per N tile
            + Kp * Np * itm(wt.dtype) * grid_m     # W re-read once per M tile
            + M * N * (itm(y2.dtype) + itm(z2.dtype) + itm(out_dtype))
            + Np * 4
        ),
    )

    # Weight streaming for decode-style shapes: deepen buffering to hide DMA gaps.
    if grid_m == 1 and grid_k >= 4:
        wt_spec = pl.BlockSpec((tk_eff, tn_eff), lambda i, j, k: (k, j),
                               pipeline_mode=pl.Buffered(3))
    else:
        wt_spec = pl.BlockSpec((tk_eff, tn_eff), lambda i, j, k: (k, j))

    out2 = pl.pallas_call(
        kernel,
        out_shape=jax.ShapeDtypeStruct((M, N), out_dtype),
        grid_spec=pltpu.PrefetchScalarGridSpec(
            num_scalar_prefetch=0,
            grid=grid,
            in_specs=[
                pl.BlockSpec((tm_eff, tk_eff), lambda i, j, k: (i, k)),  # x
                wt_spec,                                                  # W^T
                pl.BlockSpec((1, tn_eff), lambda i, j, k: (0, j)),        # bias
                pl.BlockSpec((tm_eff, tn_eff), lambda i, j, k: (i, j)),   # y
                pl.BlockSpec((tm_eff, tn_eff), lambda i, j, k: (i, j)),   # z
            ],
            out_specs=pl.BlockSpec((tm_eff, tn_eff), lambda i, j, k: (i, j)),
            scratch_shapes=scratch_shapes,
        ),
        compiler_params=pltpu.CompilerParams(
            dimension_semantics=("parallel", "parallel", "arbitrary"),
            vmem_limit_bytes=vmem_limit,
        ),
        cost_estimate=cost,
    )(x2, wt, bias2d, y2, z2)

    return out2.reshape(*lead, N)


if __name__ == "__main__":
    # Small shapes consistent with the module: batch=2, seq=8, hidden=32.
    batch, seq, in_features, out_features = 2, 8, 32, 32

    key = jax.random.PRNGKey(0)
    kx, ky, kz, kw, kb = jax.random.split(key, 5)

    x = jax.random.normal(kx, (batch, seq, in_features), dtype=jnp.float32)
    y = jax.random.normal(ky, (batch, seq, out_features), dtype=jnp.float32)
    z = jax.random.normal(kz, (batch, seq, out_features), dtype=jnp.float32)

    # Deterministic synthetic nn.Linear parameters (PyTorch layout [out, in]).
    weight = jax.random.normal(kw, (out_features, in_features), dtype=jnp.float32) * 0.05
    bias = jax.random.normal(kb, (out_features,), dtype=jnp.float32) * 0.01

    # One-time parameter prep (transpose + bf16 cast + lane padding).
    # TODO(synk): callers needing strict f32 fidelity vs the PyTorch op should
    # pass compute_dtype=jnp.float32 here (slower, exact f32 matmul path).
    wt, b2 = prepare_params(weight, bias, compute_dtype=jnp.bfloat16)

    out = linear_add_add(x, wt, b2, y, z)
    out = jax.block_until_ready(out)
    assert out.shape == (batch, seq, out_features)

    # Reference with matched bf16 matmul inputs (f32 accumulation).
    xb = x.astype(jnp.bfloat16).astype(jnp.float32)
    wb = weight.T.astype(jnp.bfloat16).astype(jnp.float32)
    ref = xb @ wb + bias + y + z
    assert jnp.allclose(out, ref, atol=1e-3, rtol=1e-3), "mismatch vs bf16-matched reference"

    # Loose sanity check against the full-f32 reference.
    ref_f32 = x @ weight.T + bias + y + z
    assert jnp.allclose(out, ref_f32, atol=5e-2, rtol=5e-2), "mismatch vs f32 reference"

    print("KERNEL_OK")
</pallas_src>

<mosaic_0001>
module attributes {stable_mosaic.version = 11 : i64} {
  func.func @_linear_add_add_kernel_f32out(%arg0: i32, %arg1: i32, %arg2: i32, %arg3: memref<16x32xbf16, #tpu.memory_space<vmem>>, %arg4: memref<32x128xbf16, #tpu.memory_space<vmem>>, %arg5: memref<1x128xf32, #tpu.memory_space<vmem>>, %arg6: memref<16x128xf32, #tpu.memory_space<vmem>>, %arg7: memref<16x128xf32, #tpu.memory_space<vmem>>, %arg8: memref<16x128xf32, #tpu.memory_space<vmem>>) attributes {dimension_semantics = [#tpu.dimension_semantics<parallel>, #tpu.dimension_semantics<parallel>, #tpu.dimension_semantics<arbitrary>], iteration_bounds = array<i64: 1, 1, 1>, scalar_prefetch = 0 : i64, scratch_operands = 0 : i64, tpu.core_type = #tpu.core_type<tc>, window_params = [{transform_indices = @transform_0, window_bounds = array<i64: 16, 32>}, {transform_indices = @transform_1, window_bounds = array<i64: 32, 128>}, {transform_indices = @transform_2, window_bounds = array<i64: 1, 128>}, {transform_indices = @transform_3, window_bounds = array<i64: 16, 128>}, {transform_indices = @transform_4, window_bounds = array<i64: 16, 128>}, {transform_indices = @transform_5, window_bounds = array<i64: 16, 128>}]} {
    %c0_i32 = arith.constant 0 : i32
    %0 = arith.cmpi eq, %arg2, %c0_i32 : i32
    %1 = arith.extui %0 : i1 to i32
    %c0_i32_0 = arith.constant 0 : i32
    %2 = arith.cmpi ne, %1, %c0_i32_0 : i32
    scf.if %2 {
      %c0_8 = arith.constant 0 : index
      %c0_9 = arith.constant 0 : index
      %9 = vector.load %arg5[%c0_8, %c0_9] : memref<1x128xf32, #tpu.memory_space<vmem>>, vector<1x128xf32>
      %c0_10 = arith.constant 0 : index
      %c0_11 = arith.constant 0 : index
      %10 = vector.load %arg6[%c0_10, %c0_11] : memref<16x128xf32, #tpu.memory_space<vmem>>, vector<16x128xf32>
      %11 = vector.broadcast %9 : vector<1x128xf32> to vector<16x128xf32>
      %12 = arith.addf %11, %10 : vector<16x128xf32>
      %c0_12 = arith.constant 0 : index
      %c0_13 = arith.constant 0 : index
      %13 = vector.load %arg7[%c0_12, %c0_13] : memref<16x128xf32, #tpu.memory_space<vmem>>, vector<16x128xf32>
      %14 = arith.addf %12, %13 : vector<16x128xf32>
      %c0_14 = arith.constant 0 : index
      %c0_15 = arith.constant 0 : index
      %15 = vector.load %arg8[%c0_14, %c0_15] : memref<16x128xf32, #tpu.memory_space<vmem>>, vector<16x128xf32>
      tpu.vector_store %arg8[%c0_14, %c0_15], %14 {strides = array<i32>} : memref<16x128xf32, #tpu.memory_space<vmem>>, vector<16x128xf32>,
    } else {
    }
    %c0 = arith.constant 0 : index
    %c0_1 = arith.constant 0 : index
    %3 = vector.load %arg8[%c0, %c0_1] : memref<16x128xf32, #tpu.memory_space<vmem>>, vector<16x128xf32>
    %c0_2 = arith.constant 0 : index
    %c0_3 = arith.constant 0 : index
    %4 = vector.load %arg3[%c0_2, %c0_3] : memref<16x32xbf16, #tpu.memory_space<vmem>>, vector<16x32xbf16>
    %c0_4 = arith.constant 0 : index
    %c0_5 = arith.constant 0 : index
    %5 = vector.load %arg4[%c0_4, %c0_5] : memref<32x128xbf16, #tpu.memory_space<vmem>>, vector<32x128xbf16>
    %cst = arith.constant dense<0.000000e+00> : vector<16x128xf32>
    %6 = tpu.matmul %4, %5, %cst {dimension_numbers = #tpu.dot_dimension_numbers<[1], [0], [0], [1], [0, 0, 1, 1], [], []>} : vector<16x32xbf16>, vector<32x128xbf16>, vector<16x128xf32> -> vector<16x128xf32>
    %7 = arith.addf %3, %6 : vector<16x128xf32>
    %c0_6 = arith.constant 0 : index
    %c0_7 = arith.constant 0 : index
    %8 = vector.load %arg8[%c0_6, %c0_7] : memref<16x128xf32, #tpu.memory_space<vmem>>, vector<16x128xf32>
    tpu.vector_store %arg8[%c0_6, %c0_7], %7 {strides = array<i32>} : memref<16x128xf32, #tpu.memory_space<vmem>>, vector<16x128xf32>,
    return
  }
  func.func @transform_0(%arg0: i32, %arg1: i32, %arg2: i32) -> (i32, i32) {
    %c0_i32 = arith.constant 0 : i32
    return %arg0, %arg2 : i32, i32
  }
  func.func @transform_1(%arg0: i32, %arg1: i32, %arg2: i32) -> (i32, i32) {
    %c0_i32 = arith.constant 0 : i32
    return %arg2, %arg1 : i32, i32
  }
  func.func @transform_2(%arg0: i32, %arg1: i32, %arg2: i32) -> (i32, i32) {
    %c0_i32 = arith.constant 0 : i32
    %c0_i32_0 = arith.constant 0 : i32
    return %c0_i32, %arg1 : i32, i32
  }
  func.func @transform_3(%arg0: i32, %arg1: i32, %arg2: i32) -> (i32, i32) {
    %c0_i32 = arith.constant 0 : i32
    return %arg0, %arg1 : i32, i32
  }
  func.func @transform_4(%arg0: i32, %arg1: i32, %arg2: i32) -> (i32, i32) {
    %c0_i32 = arith.constant 0 : i32
    return %arg0, %arg1 : i32, i32
  }
  func.func @transform_5(%arg0: i32, %arg1: i32, %arg2: i32) -> (i32, i32) {
    %c0_i32 = arith.constant 0 : i32
    return %arg0, %arg1 : i32, i32
  }
}

</mosaic_0001>

<llo_original>
// kernel: linear_add_add.1
$region0: #{linear_add_add.1}
  #allocation0 [shape = 'u32[]', space=smem, size = 0x4, offset = 0x4, fixed_abs, tag = 'smem constant byte address 0x4 - core index']
  #allocation1 [shape = 'u32[144,128]{1,0:T(1,128)}', space=vmem, size = 0x12000, scoped, tag = 'internal scratch']
  %s0 = inlined_call_operand.vmem [shape: bf16[16,32], index: 0, kind: input, shape index: {}]
  %s1 = inlined_call_operand.vmem [shape: bf16[32,128], index: 1, kind: input, shape index: {}]
  %s2 = inlined_call_operand.vmem [shape: f32[1,128], index: 2, kind: input, shape index: {}]
  %s3 = inlined_call_operand.vmem [shape: f32[16,32], index: 3, kind: input, shape index: {}]
  %s4 = inlined_call_operand.hbm [shape: f32[16,32], index: 4, kind: input, shape index: {}]
  %s5 = inlined_call_operand.hbm [shape: f32[16,32], index: 5, kind: output, shape index: {}]
  %s6 = sld [smem:[#allocation0]]
  $region38: #{linear_add_add.1} parent=0
    _
  %s8 = ssub.s32 1, %s6
  %s9 = scalar_select 0, %s8, %s6
  $region1: #{linear_add_add.1} parent=0
    #allocation2 [shape = 'u8[8192]{0}', space=vmem, size = 0x2000, scoped, tag = 'input window, operand 4, single buffered']
    #allocation3 [shape = 's32[1]{0}', space=sflag, size = 0x4, scoped, tag = 'scoped memory for linear_add_add.1']
    #allocation4 [shape = 's32[1]{0}', space=sflag, size = 0x4, scoped, tag = 'scoped memory for linear_add_add.1']
    #allocation5 [shape = 'u8[8192]{0}', space=vmem, size = 0x2000, scoped, tag = 'output window, operand 0, single buffered']
    %10 = vsyncpa [#allocation3], 0
    %11 = vsyncpa [#allocation4], 0
    // Predicated region
    $region2: #{linear_add_add.1} parent=1 // pred_check
      _
    $region3: #{linear_add_add.1} parent=1 // pred_check_branch
      %13 = sbr.rel (0) target = $region5
    $region4: #{linear_add_add.1} parent=1 // pred_region
      _
    $region5: #{linear_add_add.1} parent=1 // pred_fallthru
      _
    // Predicated region
    $region6: #{linear_add_add.1} parent=1 // pred_check
      _
    $region7: #{linear_add_add.1} parent=1 // pred_check_branch
      %15 = sbr.rel (0) target = $region9
    $region8: #{linear_add_add.1} parent=1 // pred_region
      _
    $region9: #{linear_add_add.1} parent=1 // pred_fallthru
      _
    // Predicated region
    $region10: #{linear_add_add.1} parent=1 // pred_check
      _
    $region11: #{linear_add_add.1} parent=1 // pred_check_branch
      %17 = sbr.rel (0) target = $region13
    $region12: #{linear_add_add.1} parent=1 // pred_region
      _
    $region13: #{linear_add_add.1} parent=1 // pred_fallthru
      _
    // Predicated region
    $region14: #{linear_add_add.1} parent=1 // pred_check
      _
    $region15: #{linear_add_add.1} parent=1 // pred_check_branch
      %19 = sbr.rel (0) target = $region17
    $region16: #{linear_add_add.1} parent=1 // pred_region
      _
    $region17: #{linear_add_add.1} parent=1 // pred_fallthru
      _
    // Predicated region
    $region18: #{linear_add_add.1} parent=1 // pred_check
      _
    $region19: #{linear_add_add.1} parent=1 // pred_check_branch
      %21 = sbr.rel (0) target = $region21
    $region20: #{linear_add_add.1} parent=1 // pred_region
      %s23 = ssub.s32 256, 256
      %24 = vsyncadd [#allocation3], %s23
      %s25 = sshll.u32 [#allocation2], 4
      %s26 = int_to_ptr.vmem [resolvable:$true] %s25
      %31 = dma.hbm_to_vmem [thread:$0]  %s4, 256, %s26, [#allocation3], 128, 128, 8
    $region21: #{linear_add_add.1} parent=1 // pred_fallthru
      _
    // Predicated region
    $region22: #{linear_add_add.1} parent=1 // pred_check
      _
    $region23: #{linear_add_add.1} parent=1 // pred_check_branch
      %33 = sbr.rel (0) target = $region25
    $region24: #{linear_add_add.1} parent=1 // pred_region
      %34 = dma.done [#allocation3], 256
    $region25: #{linear_add_add.1} parent=1 // pred_fallthru
      _
    %p36 = scmp.eq.s32.totalorder 0, 0
    // Predicated region
    $region26: #{linear_add_add.1} parent=1 // pred_check
      %p37 = pneg %p36
    $region27: #{linear_add_add.1} parent=1 // pred_check_branch
      %39 = sbr.rel (%p37) target = $region29
    $region28: #{linear_add_add.1} parent=1 // pred_region
      %v40 = vld [vmem:[%s2] sm:$0x1]
      %v41 = vld [vmem:[%s3] sm:$0xff]
      %v42 = vld [vmem:[%s3 + $0x8] sm:$0xff]
      %v44 = vlaneseq
      %v45 = vshrl.u32 %v44, 7
      %v46 = vsub.s32 0, %v45
      %v47 = vrot.slane %v40, %v46
      %v49 = vadd.f32 %v47, %v41
      %v50 = vadd.f32 %v47, %v42
      %v51 = vld [vmem:[#allocation2] sm:$0xff]
      %v52 = vld [vmem:[#allocation2 + $0x8] sm:$0xff]
      %v53 = vadd.f32 %v49, %v51
      %v54 = vadd.f32 %v50, %v52
      %55 = vst [vmem:[#allocation5] sm:$0xff] %v53
      %56 = vst [vmem:[#allocation5 + $0x8] sm:$0xff] %v54
    $region29: #{linear_add_add.1} parent=1 // pred_fallthru
      _
    %v57 = vld [vmem:[#allocation5] sm:$0xff]
    %v58 = vld [vmem:[#allocation5 + $0x8] sm:$0xff]
    %v59 = vld [vmem:[%s0] sm:$0xf]
    %v60 = vld [vmem:[%s0 + $0x4] sm:$0xf]
    %v61 = vld [vmem:[%s1] sm:$0xf]
    %v62 = vld [vmem:[%s1 + $0x4] sm:$0xf]
    %v63 = vld [vmem:[%s1 + $0x8] sm:$0xf]
    %v64 = vld [vmem:[%s1 + $0xc] sm:$0xf]
    %v67 = vunpack.c.l.b16 %v59
    %v68 = vunpack.c.l.b16 %v60
    %v69 = vpack.c.b16 %v68, %v67
    %v74 = vunpack.c.l.b16 %v61
    %v75 = vunpack.c.l.b16 %v62
    %v76 = vunpack.c.l.b16 %v63
    %v77 = vunpack.c.l.b16 %v64
    %v78 = vpack.c.b16 %v75, %v74
    %v79 = vpack.c.b16 %v77, %v76
    %vm82 = vcmask 261120
    %v84 = vsel %vm82, %v69, 0
    %86 = vmatprep.subr.bf16.mxu0 0
    %87 = vmatpush1.bf16.msra.mxu0 0
    %88 = vmatprep.subr.bf16.mxu0 0
    %89 = vmatpush1.bf16.msra.mxu0 0
    %90 = vmatprep.subr.bf16.mxu0 0
    %91 = vmatpush1.bf16.msra.mxu0 0
    %92 = vmatprep.subr.bf16.mxu0 0
    %93 = vmatpush1.bf16.msra.mxu0 0
    %94 = vmatprep.subr.bf16.mxu0 0
    %95 = vmatpush1.bf16.msra.mxu0 0
    %96 = vmatprep.subr.bf16.mxu0 0
    %97 = vmatpush1.bf16.msra.mxu0 0
    %98 = vmatprep.subr.bf16.mxu0 0
    %99 = vmatpush1.bf16.msra.mxu0 %v79
    %100 = vmatprep.subr.bf16.mxu0 0
    %101 = vmatpush1.bf16.msra.mxu0 %v78
    %102 = vmatprep.subr.bf16.mxu0 0
    %103 = vmatpush2.bf16.msra.mxu0 0
    %104 = vmatprep.subr.bf16.mxu0 0
    %105 = vmatpush2.bf16.msra.mxu0 0
    %106 = vmatprep.subr.bf16.mxu0 0
    %107 = vmatpush2.bf16.msra.mxu0 0
    %108 = vmatprep.subr.bf16.mxu0 0
    %109 = vmatpush2.bf16.msra.mxu0 0
    %110 = vmatprep.subr.bf16.mxu0 0
    %111 = vmatpush2.bf16.msra.mxu0 0
    %112 = vmatprep.subr.bf16.mxu0 0
    %113 = vmatpush2.bf16.msra.mxu0 0
    %114 = vmatprep.subr.bf16.mxu0 0
    %115 = vmatpush2.bf16.msra.mxu0 0
    %116 = vmatprep.subr.bf16.mxu0 0
    %117 = vmatpush2.bf16.msra.mxu0 0
    %118 = vmatprep.mubr.bf16.mxu0 0
    %119 = vmatmul.mubr.bf16.gmra.mxu0 %v84
    %v120 = vpop.f32.mrf.mxu0
    %v121 = vadd.f32 0.0, %v120
    %v122 = vpop.f32.mrf.mxu0
    %v123 = vpop.f32.mrf.mxu0
    %v124 = vadd.f32 0.0, %v123
    %v125 = vpop.f32.mrf.mxu0
    %126 = vdwg.mxu0
    %v127 = vadd.f32 %v57, %v121
    %v128 = vadd.f32 %v58, %v124
    %129 = vst [vmem:[#allocation5] sm:$0xff] %v127
    %130 = vst [vmem:[#allocation5 + $0x8] sm:$0xff] %v128
    // Predicated region
    $region30: #{linear_add_add.1} parent=1 // pred_check
      _
    $region31: #{linear_add_add.1} parent=1 // pred_check_branch
      %132 = sbr.rel (0) target = $region33
    $region32: #{linear_add_add.1} parent=1 // pred_region
      %s134 = ssub.s32 256, 256
      %135 = vsyncadd [#allocation4], %s134
      %s136 = sshll.u32 [#allocation5], 4
      %s137 = int_to_ptr.vmem [resolvable:$true] %s136
      %142 = dma.vmem_to_hbm [thread:$0]  %s137, 256, %s5, [#allocation4], 128, 128, 8
    $region33: #{linear_add_add.1} parent=1 // pred_fallthru
      _
    // Predicated region
    $region34: #{linear_add_add.1} parent=1 // pred_check
      _
    $region35: #{linear_add_add.1} parent=1 // pred_check_branch
      %144 = sbr.rel (0) target = $region37
    $region36: #{linear_add_add.1} parent=1 // pred_region
      %145 = dma.done [#allocation4], 256
    $region37: #{linear_add_add.1} parent=1 // pred_fallthru
      _
    %146 = vsyncpa [#allocation3], 1
    %147 = vsyncpa [#allocation4], 1

</llo_original>
